<compile_context>
chip_gen: v7x
topology: tpu7x:2x2x1
jax: 0.10.0
libtpu: 0.0.40
codegen_flags: <defaults>
</compile_context>

<pallas_src>
import functools
import math

import jax
import jax.numpy as jnp
from jax.experimental import pallas as pl
from jax.experimental.pallas import tpu as pltpu


# ----------------------------------------------------------------------------
# Pallas kernel: NeXtVLAD forward for a tile of Bt batch elements.
# ----------------------------------------------------------------------------
def _nextvlad_kernel(x_ref, w1_ref, w2_ref, w3_ref, b3_ref, w4_ref,
                     s2_ref, t2_ref, out_ref, *, groups, cluster_size):
    Bt, M, F = x_ref.shape
    G = groups
    C = cluster_size
    EF = w1_ref.shape[1]
    fs = EF // G

    # ---- Phase 1: batched matmuls over all Bt*M frame rows -----------------
    x2 = x_ref[...].reshape(Bt * M, F)                                       # (Bt*M, F)
    xe = jnp.dot(x2, w1_ref[...], preferred_element_type=jnp.float32)       # (Bt*M, EF)
    att = jax.nn.sigmoid(
        jnp.dot(xe, w2_ref[...], preferred_element_type=jnp.float32))       # (Bt*M, G)
    # One fused matmul for all G groups; BN1 (eval) folded into w3 + bias.
    act = jnp.dot(xe, w3_ref[...], preferred_element_type=jnp.float32)      # (Bt*M, G*C)
    act = act + b3_ref[...]

    # ---- Phase 2: per-group softmax * attention on lane slices -------------
    parts = []
    for g in range(G):
        ag = jax.nn.softmax(act[:, g * C:(g + 1) * C], axis=-1)             # (Bt*M, C)
        ag = ag * att[:, g:g + 1]
        parts.append(ag)
    actw = jnp.concatenate(parts, axis=-1)                                  # (Bt*M, G*C)

    inv_mg = 1.0 / float(M * G)
    w4 = w4_ref[...]                                                        # (fs, C)
    s2 = s2_ref[...]                                                        # (fs, C)
    t2 = t2_ref[...]                                                        # (fs, C)

    # ---- Phase 3: per-video VLAD descriptor (statically unrolled over Bt) --
    rows = []
    for b in range(Bt):
        xe_b = xe[b * M:(b + 1) * M, :]                                     # (M, EF)
        aw_b = actw[b * M:(b + 1) * M, :]                                   # (M, G*C)

        # Single A^T.B contraction per video (transpose hoisted out of the
        # group loop); the needed per-group (fs, C) blocks are its diagonal.
        vf = jax.lax.dot_general(xe_b, aw_b, (((0,), (0,)), ((), ())),
                                 preferred_element_type=jnp.float32)        # (EF, G*C)
        vlad_b = vf[0:fs, 0:C]
        for g in range(1, G):
            vlad_b = vlad_b + vf[g * fs:(g + 1) * fs, g * C:(g + 1) * C]    # (fs, C)

        # a_sum = mean over M*G of the weighted activation (per cluster).
        col = jnp.sum(aw_b, axis=0, keepdims=True)                          # (1, G*C)
        a_sum = col[:, 0:C]
        for g in range(1, G):
            a_sum = a_sum + col[:, g * C:(g + 1) * C]                       # (1, C)
        vlad_b = vlad_b - (a_sum * inv_mg) * w4                             # (fs, C)

        # F.normalize(p=2, dim=1): L2 over the fs axis.
        ss = jnp.sum(vlad_b * vlad_b, axis=0, keepdims=True)                # (1, C)
        vlad_b = vlad_b / jnp.maximum(jnp.sqrt(ss), 1e-12)

        # Folded bn2 (eval mode).
        vlad_b = vlad_b * s2 + t2

        # Row-major flatten (index f*C + c) into a lane-dense (1, fs*C) row.
        rows.append(jnp.concatenate([vlad_b[f:f + 1, :] for f in range(fs)],
                                    axis=1))

    out = rows[0] if Bt == 1 else jnp.concatenate(rows, axis=0)             # (Bt, fs*C)
    out_ref[0] = out.astype(out_ref.dtype)


# ----------------------------------------------------------------------------
# Wrapper: pallas_call over batch tiles.
# ----------------------------------------------------------------------------
def nextvlad_forward(x, params, *, groups, cluster_size, block_batch=None):
    """x: (B, max_frames, feature_size) f32 -> (B, cluster_size*fs) f32."""
    B, M, F = x.shape
    EF = params["w1"].shape[1]
    fs = EF // groups
    C = cluster_size

    # Batch tile: keep >=2 grid steps (so both v7x TensorCores get work) and a
    # small cap so double-buffered input tiles + resident params stay far under
    # the v7x 64 MiB VMEM budget (tiles here are only Bt*M*F*4 bytes).
    if block_batch is None:
        block_batch = max(1, min(8, (B + 1) // 2))
    Bt = max(1, min(block_batch, B))
    n_tiles = -(-B // Bt)
    Bpad = n_tiles * Bt
    if Bpad != B:
        x = jnp.pad(x, ((0, Bpad - B), (0, 0), (0, 0)))

    kernel = functools.partial(_nextvlad_kernel,
                               groups=groups, cluster_size=cluster_size)

    param_keys = ("w1", "w2", "w3f", "b3", "w4", "bn2_scale", "bn2_shift")

    def full_spec(a):
        return pl.BlockSpec(a.shape, lambda i, nd=a.ndim: (0,) * nd)

    in_specs = [pl.BlockSpec((Bt, M, F), lambda i: (i, 0, 0))]
    in_specs += [full_spec(params[k]) for k in param_keys]

    out = pl.pallas_call(
        kernel,
        out_shape=jax.ShapeDtypeStruct((n_tiles, Bt, fs * C), jnp.float32),
        grid=(n_tiles,),
        in_specs=in_specs,
        out_specs=pl.BlockSpec((1, Bt, fs * C), lambda i: (i, 0, 0)),
        compiler_params=pltpu.CompilerParams(
            dimension_semantics=("parallel",)),
    )(x, *[params[k] for k in param_keys])

    # (n_tiles, Bt, fs*C) -> (Bpad, fs*C) is a host-side metadata reshape.
    return out.reshape(Bpad, fs * C)[:B]


# ----------------------------------------------------------------------------
# Parameter init (mirrors NeXtVLAD.__init__ + kaiming_uniform_(mode='fan_in'))
# and host-side folding of the eval-mode BatchNorms into the weights.
# ----------------------------------------------------------------------------
def init_nextvlad_params(key, feature_size, cluster_size, expansion=2, groups=16):
    EF = expansion * feature_size
    fs = EF // groups
    GC = groups * cluster_size
    DD = cluster_size * fs
    k1, k2, k3, k4 = jax.random.split(key, 4)

    def kaiming_uniform(k, shape):
        # torch.nn.init.kaiming_uniform_(mode='fan_in') on a raw Parameter:
        # fan_in = prod(shape[1:]), gain = sqrt(2)  =>  bound = sqrt(6/fan_in).
        fan_in = 1
        for s in shape[1:]:
            fan_in *= s
        bound = math.sqrt(6.0 / fan_in)
        return jax.random.uniform(k, shape, jnp.float32, -bound, bound)

    return dict(
        w1=kaiming_uniform(k1, (feature_size, EF)),
        w2=kaiming_uniform(k2, (EF, groups)),
        w3=kaiming_uniform(k3, (EF, GC)),
        w4=kaiming_uniform(k4, (1, fs, cluster_size)),
        bn1_g=jnp.ones((GC,), jnp.float32), bn1_b=jnp.zeros((GC,), jnp.float32),
        bn1_m=jnp.zeros((GC,), jnp.float32), bn1_v=jnp.ones((GC,), jnp.float32),
        bn2_g=jnp.ones((DD,), jnp.float32), bn2_b=jnp.zeros((DD,), jnp.float32),
        bn2_m=jnp.zeros((DD,), jnp.float32), bn2_v=jnp.ones((DD,), jnp.float32),
    )


def fold_nextvlad_params(p, cluster_size, groups, eps=1e-5):
    """Fold eval-mode BN1/BN2 into weights -> kernel-ready parameter dict."""
    EF = p["w1"].shape[1]
    fs = EF // groups
    scale1 = p["bn1_g"] * jax.lax.rsqrt(p["bn1_v"] + eps)          # (G*C,)
    shift1 = p["bn1_b"] - p["bn1_m"] * scale1
    scale2 = p["bn2_g"] * jax.lax.rsqrt(p["bn2_v"] + eps)          # (fs*C,)
    shift2 = p["bn2_b"] - p["bn2_m"] * scale2
    return dict(
        w1=p["w1"],
        w2=p["w2"],
        w3f=p["w3"] * scale1[None, :],                             # (EF, G*C)
        b3=shift1[None, :],                                        # (1, G*C)
        w4=p["w4"][0],                                             # (fs, C)
        # Flattened bn2 feature j of the (fs, C) descriptor is (f, c)=(j//C, j%C).
        bn2_scale=scale2.reshape(fs, cluster_size),
        bn2_shift=shift2.reshape(fs, cluster_size),
    )


# ----------------------------------------------------------------------------
# MultiScaleNeXtVLAD: resample each video to every scale, run NeXtVLAD, concat.
# ----------------------------------------------------------------------------
def video_resample_pad_indices(video_len, src_frames, max_frames):
    # TODO(synk): exact VideoResamplePad.resample semantics are not provided;
    # a uniform-index temporal resample over the valid `video_len` frames is used.
    L = max(1, min(int(video_len), int(src_frames)))
    idx = (jnp.arange(max_frames) * L) // max_frames
    return jnp.clip(idx, 0, L - 1)


def multiscale_nextvlad_forward(x, video_lens, params_list, max_frames_list,
                                *, groups, cluster_size):
    # The reference uses meta_info[0]['video_len'] for every video in the batch,
    # so one index table per scale is shared and the resample is a single
    # batched gather (no per-video Python loop / stack).
    # TODO(synk): the resample could be fused into the kernel with a
    # scalar-prefetched index table + manual DMA gather; kept on the host here.
    vl = video_lens[0]
    T = x.shape[1]
    results = []
    for folded, max_frames in zip(params_list, max_frames_list):
        idx = video_resample_pad_indices(vl, T, max_frames)
        resampled = jnp.take(x, idx, axis=1)                       # (B, M, F)
        results.append(nextvlad_forward(resampled, folded,
                                        groups=groups, cluster_size=cluster_size))
    return jnp.concatenate(results, axis=1)


# ----------------------------------------------------------------------------
if __name__ == "__main__":
    batch = 2
    feature_size = 32
    cluster_size = 8
    expansion = 2
    groups = 4                      # must divide expansion*feature_size (64)
    max_frames_list = [8, 16]
    seq_len = 16                    # raw video length (frames)
    video_lens = [12, 12]           # meta_info[*]['video_len']

    key = jax.random.PRNGKey(0)
    kx, kp = jax.random.split(key)
    x = jax.random.normal(kx, (batch, seq_len, feature_size), dtype=jnp.float32)

    pkeys = jax.random.split(kp, len(max_frames_list))
    folded_list = []
    for i in range(len(max_frames_list)):
        raw = init_nextvlad_params(pkeys[i], feature_size, cluster_size,
                                   expansion=expansion, groups=groups)
        folded_list.append(fold_nextvlad_params(raw, cluster_size, groups))

    out = multiscale_nextvlad_forward(x, video_lens, folded_list, max_frames_list,
                                      groups=groups, cluster_size=cluster_size)
    out = jax.block_until_ready(out)

    fs = expansion * feature_size // groups
    expected = (batch, len(max_frames_list) * cluster_size * fs)
    assert out.shape == expected, (out.shape, expected)
    assert bool(jnp.all(jnp.isfinite(out)))
    print("KERNEL_OK")
</pallas_src>

<mosaic_0001>
module attributes {stable_mosaic.version = 11 : i64} {
  func.func @_nextvlad_kernel(%arg0: i32, %arg1: memref<1x8x32xf32, #tpu.memory_space<vmem>>, %arg2: memref<32x64xf32, #tpu.memory_space<vmem>>, %arg3: memref<64x4xf32, #tpu.memory_space<vmem>>, %arg4: memref<64x32xf32, #tpu.memory_space<vmem>>, %arg5: memref<1x32xf32, #tpu.memory_space<vmem>>, %arg6: memref<16x8xf32, #tpu.memory_space<vmem>>, %arg7: memref<16x8xf32, #tpu.memory_space<vmem>>, %arg8: memref<16x8xf32, #tpu.memory_space<vmem>>, %arg9: memref<1x1x128xf32, #tpu.memory_space<vmem>>) attributes {dimension_semantics = [#tpu.dimension_semantics<parallel>], iteration_bounds = array<i64: 2>, scalar_prefetch = 0 : i64, scratch_operands = 0 : i64, tpu.core_type = #tpu.core_type<tc>, window_params = [{transform_indices = @transform_0, window_bounds = array<i64: 1, 8, 32>}, {pipeline_mode = #tpu.pipeline_mode<synchronous>, transform_indices = @transform_1, window_bounds = array<i64: 32, 64>}, {pipeline_mode = #tpu.pipeline_mode<synchronous>, transform_indices = @transform_2, window_bounds = array<i64: 64, 4>}, {pipeline_mode = #tpu.pipeline_mode<synchronous>, transform_indices = @transform_3, window_bounds = array<i64: 64, 32>}, {pipeline_mode = #tpu.pipeline_mode<synchronous>, transform_indices = @transform_4, window_bounds = array<i64: 1, 32>}, {pipeline_mode = #tpu.pipeline_mode<synchronous>, transform_indices = @transform_5, window_bounds = array<i64: 16, 8>}, {pipeline_mode = #tpu.pipeline_mode<synchronous>, transform_indices = @transform_6, window_bounds = array<i64: 16, 8>}, {pipeline_mode = #tpu.pipeline_mode<synchronous>, transform_indices = @transform_7, window_bounds = array<i64: 16, 8>}, {transform_indices = @transform_8, window_bounds = array<i64: 1, 1, 128>}]} {
    %c0 = arith.constant 0 : index
    %c0_0 = arith.constant 0 : index
    %c0_1 = arith.constant 0 : index
    %0 = vector.load %arg1[%c0, %c0_0, %c0_1] : memref<1x8x32xf32, #tpu.memory_space<vmem>>, vector<1x8x32xf32>
    %1 = vector.shape_cast %0 : vector<1x8x32xf32> to vector<8x32xf32>
    %c0_2 = arith.constant 0 : index
    %c0_3 = arith.constant 0 : index
    %2 = vector.load %arg2[%c0_2, %c0_3] : memref<32x64xf32, #tpu.memory_space<vmem>>, vector<32x64xf32>
    %cst = arith.constant dense<0.000000e+00> : vector<8x64xf32>
    %3 = tpu.matmul %1, %2, %cst {dimension_numbers = #tpu.dot_dimension_numbers<[1], [0], [0], [1], [0, 0, 1, 1], [], []>} : vector<8x32xf32>, vector<32x64xf32>, vector<8x64xf32> -> vector<8x64xf32>
    %c0_4 = arith.constant 0 : index
    %c0_5 = arith.constant 0 : index
    %4 = vector.load %arg3[%c0_4, %c0_5] : memref<64x4xf32, #tpu.memory_space<vmem>>, vector<64x4xf32>
    %cst_6 = arith.constant dense<0.000000e+00> : vector<8x4xf32>
    %5 = tpu.matmul %3, %4, %cst_6 {dimension_numbers = #tpu.dot_dimension_numbers<[1], [0], [0], [1], [0, 0, 1, 1], [], []>} : vector<8x64xf32>, vector<64x4xf32>, vector<8x4xf32> -> vector<8x4xf32>
    %6 = arith.negf %5 : vector<8x4xf32>
    %7 = math.exp %6 : vector<8x4xf32>
    %cst_7 = arith.constant 1.000000e+00 : f32
    %8 = vector.broadcast %cst_7 : f32 to vector<8x4xf32>
    %9 = arith.addf %8, %7 : vector<8x4xf32>
    %10 = arith.divf %8, %9 : vector<8x4xf32>
    %c0_8 = arith.constant 0 : index
    %c0_9 = arith.constant 0 : index
    %11 = vector.load %arg4[%c0_8, %c0_9] : memref<64x32xf32, #tpu.memory_space<vmem>>, vector<64x32xf32>
    %cst_10 = arith.constant dense<0.000000e+00> : vector<8x32xf32>
    %12 = tpu.matmul %3, %11, %cst_10 {dimension_numbers = #tpu.dot_dimension_numbers<[1], [0], [0], [1], [0, 0, 1, 1], [], []>} : vector<8x64xf32>, vector<64x32xf32>, vector<8x32xf32> -> vector<8x32xf32>
    %c0_11 = arith.constant 0 : index
    %c0_12 = arith.constant 0 : index
    %13 = vector.load %arg5[%c0_11, %c0_12] : memref<1x32xf32, #tpu.memory_space<vmem>>, vector<1x32xf32>
    %14 = vector.broadcast %13 : vector<1x32xf32> to vector<8x32xf32>
    %15 = arith.addf %12, %14 : vector<8x32xf32>
    %16 = vector.extract_strided_slice %15 {offsets = [0, 0], sizes = [8, 8], strides = [1, 1]} : vector<8x32xf32> to vector<8x8xf32>
    %cst_13 = arith.constant dense<0xFF800000> : vector<8xf32>
    %17 = vector.multi_reduction <maximumf>, %16, %cst_13 [1] : vector<8x8xf32> to vector<8xf32>
    %cst_14 = arith.constant 0xFF800000 : f32
    %18 = vector.broadcast %cst_14 : f32 to vector<8xf32>
    %19 = arith.maximumf %18, %17 : vector<8xf32>
    %20 = vector.shape_cast %19 : vector<8xf32> to vector<8x1xf32>
    %21 = vector.broadcast %20 : vector<8x1xf32> to vector<8x8xf32>
    %22 = arith.subf %16, %21 : vector<8x8xf32>
    %23 = math.exp %22 : vector<8x8xf32>
    %cst_15 = arith.constant dense<0.000000e+00> : vector<8xf32>
    %24 = vector.multi_reduction <add>, %23, %cst_15 [1] : vector<8x8xf32> to vector<8xf32>
    %25 = vector.shape_cast %24 : vector<8xf32> to vector<8x1xf32>
    %26 = vector.broadcast %25 : vector<8x1xf32> to vector<8x8xf32>
    %27 = arith.divf %23, %26 : vector<8x8xf32>
    %28 = vector.extract_strided_slice %10 {offsets = [0, 0], sizes = [8, 1], strides = [1, 1]} : vector<8x4xf32> to vector<8x1xf32>
    %29 = vector.broadcast %28 : vector<8x1xf32> to vector<8x8xf32>
    %30 = arith.mulf %27, %29 : vector<8x8xf32>
    %31 = vector.extract_strided_slice %15 {offsets = [0, 8], sizes = [8, 8], strides = [1, 1]} : vector<8x32xf32> to vector<8x8xf32>
    %cst_16 = arith.constant dense<0xFF800000> : vector<8xf32>
    %32 = vector.multi_reduction <maximumf>, %31, %cst_16 [1] : vector<8x8xf32> to vector<8xf32>
    %cst_17 = arith.constant 0xFF800000 : f32
    %33 = vector.broadcast %cst_17 : f32 to vector<8xf32>
    %34 = arith.maximumf %33, %32 : vector<8xf32>
    %35 = vector.shape_cast %34 : vector<8xf32> to vector<8x1xf32>
    %36 = vector.broadcast %35 : vector<8x1xf32> to vector<8x8xf32>
    %37 = arith.subf %31, %36 : vector<8x8xf32>
    %38 = math.exp %37 : vector<8x8xf32>
    %cst_18 = arith.constant dense<0.000000e+00> : vector<8xf32>
    %39 = vector.multi_reduction <add>, %38, %cst_18 [1] : vector<8x8xf32> to vector<8xf32>
    %40 = vector.shape_cast %39 : vector<8xf32> to vector<8x1xf32>
    %41 = vector.broadcast %40 : vector<8x1xf32> to vector<8x8xf32>
    %42 = arith.divf %38, %41 : vector<8x8xf32>
    %43 = vector.extract_strided_slice %10 {offsets = [0, 1], sizes = [8, 1], strides = [1, 1]} : vector<8x4xf32> to vector<8x1xf32>
    %44 = vector.broadcast %43 : vector<8x1xf32> to vector<8x8xf32>
    %45 = arith.mulf %42, %44 : vector<8x8xf32>
    %46 = vector.extract_strided_slice %15 {offsets = [0, 16], sizes = [8, 8], strides = [1, 1]} : vector<8x32xf32> to vector<8x8xf32>
    %cst_19 = arith.constant dense<0xFF800000> : vector<8xf32>
    %47 = vector.multi_reduction <maximumf>, %46, %cst_19 [1] : vector<8x8xf32> to vector<8xf32>
    %cst_20 = arith.constant 0xFF800000 : f32
    %48 = vector.broadcast %cst_20 : f32 to vector<8xf32>
    %49 = arith.maximumf %48, %47 : vector<8xf32>
    %50 = vector.shape_cast %49 : vector<8xf32> to vector<8x1xf32>
    %51 = vector.broadcast %50 : vector<8x1xf32> to vector<8x8xf32>
    %52 = arith.subf %46, %51 : vector<8x8xf32>
    %53 = math.exp %52 : vector<8x8xf32>
    %cst_21 = arith.constant dense<0.000000e+00> : vector<8xf32>
    %54 = vector.multi_reduction <add>, %53, %cst_21 [1] : vector<8x8xf32> to vector<8xf32>
    %55 = vector.shape_cast %54 : vector<8xf32> to vector<8x1xf32>
    %56 = vector.broadcast %55 : vector<8x1xf32> to vector<8x8xf32>
    %57 = arith.divf %53, %56 : vector<8x8xf32>
    %58 = vector.extract_strided_slice %10 {offsets = [0, 2], sizes = [8, 1], strides = [1, 1]} : vector<8x4xf32> to vector<8x1xf32>
    %59 = vector.broadcast %58 : vector<8x1xf32> to vector<8x8xf32>
    %60 = arith.mulf %57, %59 : vector<8x8xf32>
    %61 = vector.extract_strided_slice %15 {offsets = [0, 24], sizes = [8, 8], strides = [1, 1]} : vector<8x32xf32> to vector<8x8xf32>
    %cst_22 = arith.constant dense<0xFF800000> : vector<8xf32>
    %62 = vector.multi_reduction <maximumf>, %61, %cst_22 [1] : vector<8x8xf32> to vector<8xf32>
    %cst_23 = arith.constant 0xFF800000 : f32
    %63 = vector.broadcast %cst_23 : f32 to vector<8xf32>
    %64 = arith.maximumf %63, %62 : vector<8xf32>
    %65 = vector.shape_cast %64 : vector<8xf32> to vector<8x1xf32>
    %66 = vector.broadcast %65 : vector<8x1xf32> to vector<8x8xf32>
    %67 = arith.subf %61, %66 : vector<8x8xf32>
    %68 = math.exp %67 : vector<8x8xf32>
    %cst_24 = arith.constant dense<0.000000e+00> : vector<8xf32>
    %69 = vector.multi_reduction <add>, %68, %cst_24 [1] : vector<8x8xf32> to vector<8xf32>
    %70 = vector.shape_cast %69 : vector<8xf32> to vector<8x1xf32>
    %71 = vector.broadcast %70 : vector<8x1xf32> to vector<8x8xf32>
    %72 = arith.divf %68, %71 : vector<8x8xf32>
    %73 = vector.extract_strided_slice %10 {offsets = [0, 3], sizes = [8, 1], strides = [1, 1]} : vector<8x4xf32> to vector<8x1xf32>
    %74 = vector.broadcast %73 : vector<8x1xf32> to vector<8x8xf32>
    %75 = arith.mulf %72, %74 : vector<8x8xf32>
    %76 = tpu.concatenate %30, %45, %60, %75 in 1 : vector<8x8xf32>, vector<8x8xf32>, vector<8x8xf32>, vector<8x8xf32> -> vector<8x32xf32>
    %c0_25 = arith.constant 0 : index
    %c0_26 = arith.constant 0 : index
    %77 = vector.load %arg6[%c0_25, %c0_26] : memref<16x8xf32, #tpu.memory_space<vmem>>, vector<16x8xf32>
    %c0_27 = arith.constant 0 : index
    %c0_28 = arith.constant 0 : index
    %78 = vector.load %arg7[%c0_27, %c0_28] : memref<16x8xf32, #tpu.memory_space<vmem>>, vector<16x8xf32>
    %c0_29 = arith.constant 0 : index
    %c0_30 = arith.constant 0 : index
    %79 = vector.load %arg8[%c0_29, %c0_30] : memref<16x8xf32, #tpu.memory_space<vmem>>, vector<16x8xf32>
    %cst_31 = arith.constant dense<0.000000e+00> : vector<64x32xf32>
    %80 = tpu.matmul %3, %76, %cst_31 {dimension_numbers = #tpu.dot_dimension_numbers<[0], [0], [1], [1], [0, 1, 1, 1], [], []>} : vector<8x64xf32>, vector<8x32xf32>, vector<64x32xf32> -> vector<64x32xf32>
    %81 = vector.extract_strided_slice %80 {offsets = [0, 0], sizes = [16, 8], strides = [1, 1]} : vector<64x32xf32> to vector<16x8xf32>
    %82 = vector.extract_strided_slice %80 {offsets = [16, 8], sizes = [16, 8], strides = [1, 1]} : vector<64x32xf32> to vector<16x8xf32>
    %83 = arith.addf %81, %82 : vector<16x8xf32>
    %84 = vector.extract_strided_slice %80 {offsets = [32, 16], sizes = [16, 8], strides = [1, 1]} : vector<64x32xf32> to vector<16x8xf32>
    %85 = arith.addf %83, %84 : vector<16x8xf32>
    %86 = vector.extract_strided_slice %80 {offsets = [48, 24], sizes = [16, 8], strides = [1, 1]} : vector<64x32xf32> to vector<16x8xf32>
    %87 = arith.addf %85, %86 : vector<16x8xf32>
    %cst_32 = arith.constant dense<0.000000e+00> : vector<32xf32>
    %88 = vector.multi_reduction <add>, %76, %cst_32 [0] : vector<8x32xf32> to vector<32xf32>
    %89 = vector.shape_cast %88 : vector<32xf32> to vector<1x32xf32>
    %90 = vector.extract_strided_slice %89 {offsets = [0, 0], sizes = [1, 8], strides = [1, 1]} : vector<1x32xf32> to vector<1x8xf32>
    %91 = vector.extract_strided_slice %89 {offsets = [0, 8], sizes = [1, 8], strides = [1, 1]} : vector<1x32xf32> to vector<1x8xf32>
    %92 = arith.addf %90, %91 : vector<1x8xf32>
    %93 = vector.extract_strided_slice %89 {offsets = [0, 16], sizes = [1, 8], strides = [1, 1]} : vector<1x32xf32> to vector<1x8xf32>
    %94 = arith.addf %92, %93 : vector<1x8xf32>
    %95 = vector.extract_strided_slice %89 {offsets = [0, 24], sizes = [1, 8], strides = [1, 1]} : vector<1x32xf32> to vector<1x8xf32>
    %96 = arith.addf %94, %95 : vector<1x8xf32>
    %cst_33 = arith.constant 3.125000e-02 : f32
    %97 = vector.broadcast %cst_33 : f32 to vector<1x8xf32>
    %98 = arith.mulf %96, %97 : vector<1x8xf32>
    %99 = vector.broadcast %98 : vector<1x8xf32> to vector<16x8xf32>
    %100 = arith.mulf %99, %77 : vector<16x8xf32>
    %101 = arith.subf %87, %100 : vector<16x8xf32>
    %102 = arith.mulf %101, %101 : vector<16x8xf32>
    %cst_34 = arith.constant dense<0.000000e+00> : vector<8xf32>
    %103 = vector.multi_reduction <add>, %102, %cst_34 [0] : vector<16x8xf32> to vector<8xf32>
    %104 = vector.shape_cast %103 : vector<8xf32> to vector<1x8xf32>
    %105 = math.sqrt %104 : vector<1x8xf32>
    %cst_35 = arith.constant 9.99999996E-13 : f32
    %106 = vector.broadcast %cst_35 : f32 to vector<1x8xf32>
    %107 = arith.maximumf %105, %106 : vector<1x8xf32>
    %108 = vector.broadcast %107 : vector<1x8xf32> to vector<16x8xf32>
    %109 = arith.divf %101, %108 : vector<16x8xf32>
    %110 = arith.mulf %109, %78 : vector<16x8xf32>
    %111 = arith.addf %110, %79 : vector<16x8xf32>
    %112 = vector.extract_strided_slice %111 {offsets = [0, 0], sizes = [1, 8], strides = [1, 1]} : vector<16x8xf32> to vector<1x8xf32>
    %113 = vector.extract_strided_slice %111 {offsets = [1, 0], sizes = [1, 8], strides = [1, 1]} : vector<16x8xf32> to vector<1x8xf32>
    %114 = vector.extract_strided_slice %111 {offsets = [2, 0], sizes = [1, 8], strides = [1, 1]} : vector<16x8xf32> to vector<1x8xf32>
    %115 = vector.extract_strided_slice %111 {offsets = [3, 0], sizes = [1, 8], strides = [1, 1]} : vector<16x8xf32> to vector<1x8xf32>
    %116 = vector.extract_strided_slice %111 {offsets = [4, 0], sizes = [1, 8], strides = [1, 1]} : vector<16x8xf32> to vector<1x8xf32>
    %117 = vector.extract_strided_slice %111 {offsets = [5, 0], sizes = [1, 8], strides = [1, 1]} : vector<16x8xf32> to vector<1x8xf32>
    %118 = vector.extract_strided_slice %111 {offsets = [6, 0], sizes = [1, 8], strides = [1, 1]} : vector<16x8xf32> to vector<1x8xf32>
    %119 = vector.extract_strided_slice %111 {offsets = [7, 0], sizes = [1, 8], strides = [1, 1]} : vector<16x8xf32> to vector<1x8xf32>
    %120 = vector.extract_strided_slice %111 {offsets = [8, 0], sizes = [1, 8], strides = [1, 1]} : vector<16x8xf32> to vector<1x8xf32>
    %121 = vector.extract_strided_slice %111 {offsets = [9, 0], sizes = [1, 8], strides = [1, 1]} : vector<16x8xf32> to vector<1x8xf32>
    %122 = vector.extract_strided_slice %111 {offsets = [10, 0], sizes = [1, 8], strides = [1, 1]} : vector<16x8xf32> to vector<1x8xf32>
    %123 = vector.extract_strided_slice %111 {offsets = [11, 0], sizes = [1, 8], strides = [1, 1]} : vector<16x8xf32> to vector<1x8xf32>
    %124 = vector.extract_strided_slice %111 {offsets = [12, 0], sizes = [1, 8], strides = [1, 1]} : vector<16x8xf32> to vector<1x8xf32>
    %125 = vector.extract_strided_slice %111 {offsets = [13, 0], sizes = [1, 8], strides = [1, 1]} : vector<16x8xf32> to vector<1x8xf32>
    %126 = vector.extract_strided_slice %111 {offsets = [14, 0], sizes = [1, 8], strides = [1, 1]} : vector<16x8xf32> to vector<1x8xf32>
    %127 = vector.extract_strided_slice %111 {offsets = [15, 0], sizes = [1, 8], strides = [1, 1]} : vector<16x8xf32> to vector<1x8xf32>
    %128 = tpu.concatenate %112, %113, %114, %115, %116, %117, %118, %119, %120, %121, %122, %123, %124, %125, %126, %127 in 1 : vector<1x8xf32>, vector<1x8xf32>, vector<1x8xf32>, vector<1x8xf32>, vector<1x8xf32>, vector<1x8xf32>, vector<1x8xf32>, vector<1x8xf32>, vector<1x8xf32>, vector<1x8xf32>, vector<1x8xf32>, vector<1x8xf32>, vector<1x8xf32>, vector<1x8xf32>, vector<1x8xf32>, vector<1x8xf32> -> vector<1x128xf32>
    %c0_36 = arith.constant 0 : index
    %c0_37 = arith.constant 0 : index
    %c0_38 = arith.constant 0 : index
    %129 = vector.load %arg9[%c0_36, %c0_37, %c0_38] : memref<1x1x128xf32, #tpu.memory_space<vmem>>, vector<1x1x128xf32>
    %130 = vector.shape_cast %129 : vector<1x1x128xf32> to vector<1x128xf32>
    %131 = vector.shape_cast %128 : vector<1x128xf32> to vector<1x1x128xf32>
    tpu.vector_store %arg9[%c0_36, %c0_37, %c0_38], %131 {strides = array<i32>} : memref<1x1x128xf32, #tpu.memory_space<vmem>>, vector<1x1x128xf32>,
    return
  }
  func.func @transform_0(%arg0: i32) -> (i32, i32, i32) {
    %c0_i32 = arith.constant 0 : i32
    %c0_i32_0 = arith.constant 0 : i32
    %c0_i32_1 = arith.constant 0 : i32
    return %arg0, %c0_i32, %c0_i32_0 : i32, i32, i32
  }
  func.func @transform_1(%arg0: i32) -> (i32, i32) {
    %c0_i32 = arith.constant 0 : i32
    %c0_i32_0 = arith.constant 0 : i32
    %c0_i32_1 = arith.constant 0 : i32
    return %c0_i32, %c0_i32_0 : i32, i32
  }
  func.func @transform_2(%arg0: i32) -> (i32, i32) {
    %c0_i32 = arith.constant 0 : i32
    %c0_i32_0 = arith.constant 0 : i32
    %c0_i32_1 = arith.constant 0 : i32
    return %c0_i32, %c0_i32_0 : i32, i32
  }
  func.func @transform_3(%arg0: i32) -> (i32, i32) {
    %c0_i32 = arith.constant 0 : i32
    %c0_i32_0 = arith.constant 0 : i32
    %c0_i32_1 = arith.constant 0 : i32
    return %c0_i32, %c0_i32_0 : i32, i32
  }
  func.func @transform_4(%arg0: i32) -> (i32, i32) {
    %c0_i32 = arith.constant 0 : i32
    %c0_i32_0 = arith.constant 0 : i32
    %c0_i32_1 = arith.constant 0 : i32
    return %c0_i32, %c0_i32_0 : i32, i32
  }
  func.func @transform_5(%arg0: i32) -> (i32, i32) {
    %c0_i32 = arith.constant 0 : i32
    %c0_i32_0 = arith.constant 0 : i32
    %c0_i32_1 = arith.constant 0 : i32
    return %c0_i32, %c0_i32_0 : i32, i32
  }
  func.func @transform_6(%arg0: i32) -> (i32, i32) {
    %c0_i32 = arith.constant 0 : i32
    %c0_i32_0 = arith.constant 0 : i32
    %c0_i32_1 = arith.constant 0 : i32
    return %c0_i32, %c0_i32_0 : i32, i32
  }
  func.func @transform_7(%arg0: i32) -> (i32, i32) {
    %c0_i32 = arith.constant 0 : i32
    %c0_i32_0 = arith.constant 0 : i32
    %c0_i32_1 = arith.constant 0 : i32
    return %c0_i32, %c0_i32_0 : i32, i32
  }
  func.func @transform_8(%arg0: i32) -> (i32, i32, i32) {
    %c0_i32 = arith.constant 0 : i32
    %c0_i32_0 = arith.constant 0 : i32
    %c0_i32_1 = arith.constant 0 : i32
    return %arg0, %c0_i32, %c0_i32_0 : i32, i32, i32
  }
}

</mosaic_0001>

<llo_original>
// kernel: tpu_custom_call.1
$region0: #{tpu_custom_call.1}
  #allocation0 [shape = 'u32[]', space=smem, size = 0x4, offset = 0x4, fixed_abs, tag = 'smem constant byte address 0x4 - core index']
  #allocation1 [shape = 'u32[144,128]{1,0:T(1,128)}', space=vmem, size = 0x12000, scoped, tag = 'internal scratch']
  %s0 = inlined_call_operand.vmem [shape: f32[2,8,32], index: 0, kind: input, shape index: {}]
  %s1 = inlined_call_operand.vmem [shape: f32[32,64], index: 1, kind: input, shape index: {}]
  %s2 = inlined_call_operand.vmem [shape: f32[64,4], index: 2, kind: input, shape index: {}]
  %s3 = inlined_call_operand.vmem [shape: f32[64,32], index: 3, kind: input, shape index: {}]
  %s4 = inlined_call_operand.vmem [shape: f32[1,32], index: 4, kind: input, shape index: {}]
  %s5 = inlined_call_operand.vmem [shape: f32[16,8], index: 5, kind: input, shape index: {}]
  %s6 = inlined_call_operand.vmem [shape: f32[16,8], index: 6, kind: input, shape index: {}]
  %s7 = inlined_call_operand.vmem [shape: f32[16,8], index: 7, kind: input, shape index: {}]
  %s8 = inlined_call_operand.hbm [shape: f32[2,1,128], index: 8, kind: output, shape index: {}]
  %s9 = sld [smem:[#allocation0]]
  $region65: #{tpu_custom_call.1} parent=0
    _
  %s11 = ssub.s32 1, %s9
  %s12 = scalar_select 0, %s11, %s9
  $region1: #{tpu_custom_call.1} parent=0
    #allocation2 [shape = 'u8[1024]{0}', space=vmem, size = 0x400, scoped, tag = 'output window, operand 0']
    #allocation3 [shape = 's32[2]{0}', space=sflag, size = 0x8, scoped, tag = 'scoped memory for tpu_custom_call.1']
    %13 = vsyncpa [#allocation3], 0
    %s14 = scalar_lea.sflag [#allocation3], 1
    %15 = vsyncpa %s14, 0
    loop: start=0, step=1, limit=4
    $region2: #{tpu_custom_call.1} parent=1 // loop_pre_header
      _
    $region3: #{tpu_custom_call.1} parent=1 // loop_header
      %s17 = sphi 0, %s21
      %p18 = scmp.ge.s32.totalorder %s17, 4
      %s27 = sphi 0, %s29
      %s30 = sphi 0, %s27
      %s31 = sphi 0, %s30
      %s47 = sphi 0, %s31
      %s51 = sphi 0, %s51
      %s53 = sphi 0, %s51
      %s54 = sphi 0, %s53
      %s68 = sphi 0, %s54
      %s72 = sphi 0, %s72
      %s74 = sphi 0, %s72
      %s75 = sphi 0, %s74
      %s89 = sphi 0, %s75
      %s93 = sphi 0, %s93
      %s95 = sphi 0, %s93
      %s96 = sphi 0, %s95
      %s110 = sphi 0, %s96
      %s114 = sphi 0, %s114
      %s116 = sphi 0, %s114
      %s117 = sphi 0, %s116
      %s131 = sphi 0, %s117
      %s135 = sphi 0, %s135
      %s137 = sphi 0, %s135
      %s138 = sphi 0, %s137
      %s152 = sphi 0, %s138
      %s156 = sphi 0, %s156
      %s158 = sphi 0, %s156
      %s159 = sphi 0, %s158
      %s173 = sphi 0, %s159
      %s177 = sphi 0, %s177
      %s179 = sphi 0, %s177
      %s180 = sphi 0, %s179
      %s194 = sphi 0, %s180
      %s200 = sphi 0, %s202
      %s203 = sphi 0, %s200
      %s204 = sphi 0, %s203
      %s220 = sphi 0, %s204
    $region4: #{tpu_custom_call.1} parent=1 // loop_header_branch
      %20 = sbr.rel (%p18) target = $region8
    $region5: #{tpu_custom_call.1} parent=1 // loop_body
      %s22 = ssub.s32 %s17, 1
      %s23 = ssub.s32 %s17, 2
      %s24 = sadd.s32 %s17, 1
      %s25 = ssub.s32 %s17, %s24
      %p26 = scmp.eq.s32.totalorder %s25, 0
      %s28 = sadd.s32 %s27, 1
      %s29 = scalar_select %p26, %s27, %s28
      %p32 = pneg %p26
      %p33 = scmp.eq.s32.totalorder %s17, 1
      %p34 = por %p32, %p33
      %p35 = scmp.ne.s32.totalorder %s27, %s30
      %p36 = scmp.eq.s32.totalorder %s17, 0
      %p37 = por %p35, %p36
      %p38 = scmp.ne.s32.totalorder %s27, %s30
      %p39 = scmp.eq.s32.totalorder %s22, 1
      %p40 = por %p38, %p39
      %p41 = scmp.ne.s32.totalorder %s30, %s31
      %p42 = scmp.eq.s32.totalorder %s22, 0
      %p43 = por %p41, %p42
      %p44 = scmp.ne.s32.totalorder %s30, %s31
      %p45 = scmp.eq.s32.totalorder %s23, 1
      %p46 = por %p44, %p45
      %p48 = scmp.ne.s32.totalorder %s31, %s47
      %p49 = scmp.eq.s32.totalorder %s23, 0
      %p50 = por %p48, %p49
      %s52 = sadd.s32 %s51, 1
      %p55 = scmp.eq.s32.totalorder %s17, 1
      %p56 = scmp.ne.s32.totalorder %s51, %s53
      %p57 = scmp.eq.s32.totalorder %s17, 0
      %p58 = por %p56, %p57
      %p59 = scmp.ne.s32.totalorder %s51, %s53
      %p60 = scmp.eq.s32.totalorder %s22, 1
      %p61 = por %p59, %p60
      %p62 = scmp.ne.s32.totalorder %s53, %s54
      %p63 = scmp.eq.s32.totalorder %s22, 0
      %p64 = por %p62, %p63
      %p65 = scmp.ne.s32.totalorder %s53, %s54
      %p66 = scmp.eq.s32.totalorder %s23, 1
      %p67 = por %p65, %p66
      %p69 = scmp.ne.s32.totalorder %s54, %s68
      %p70 = scmp.eq.s32.totalorder %s23, 0
      %p71 = por %p69, %p70
      %s73 = sadd.s32 %s72, 1
      %p76 = scmp.eq.s32.totalorder %s17, 1
      %p77 = scmp.ne.s32.totalorder %s72, %s74
      %p78 = scmp.eq.s32.totalorder %s17, 0
      %p79 = por %p77, %p78
      %p80 = scmp.ne.s32.totalorder %s72, %s74
      %p81 = scmp.eq.s32.totalorder %s22, 1
      %p82 = por %p80, %p81
      %p83 = scmp.ne.s32.totalorder %s74, %s75
      %p84 = scmp.eq.s32.totalorder %s22, 0
      %p85 = por %p83, %p84
      %p86 = scmp.ne.s32.totalorder %s74, %s75
      %p87 = scmp.eq.s32.totalorder %s23, 1
      %p88 = por %p86, %p87
      %p90 = scmp.ne.s32.totalorder %s75, %s89
      %p91 = scmp.eq.s32.totalorder %s23, 0
      %p92 = por %p90, %p91
      %s94 = sadd.s32 %s93, 1
      %p97 = scmp.eq.s32.totalorder %s17, 1
      %p98 = scmp.ne.s32.totalorder %s93, %s95
      %p99 = scmp.eq.s32.totalorder %s17, 0
      %p100 = por %p98, %p99
      %p101 = scmp.ne.s32.totalorder %s93, %s95
      %p102 = scmp.eq.s32.totalorder %s22, 1
      %p103 = por %p101, %p102
      %p104 = scmp.ne.s32.totalorder %s95, %s96
      %p105 = scmp.eq.s32.totalorder %s22, 0
      %p106 = por %p104, %p105
      %p107 = scmp.ne.s32.totalorder %s95, %s96
      %p108 = scmp.eq.s32.totalorder %s23, 1
      %p109 = por %p107, %p108
      %p111 = scmp.ne.s32.totalorder %s96, %s110
      %p112 = scmp.eq.s32.totalorder %s23, 0
      %p113 = por %p111, %p112
      %s115 = sadd.s32 %s114, 1
      %p118 = scmp.eq.s32.totalorder %s17, 1
      %p119 = scmp.ne.s32.totalorder %s114, %s116
      %p120 = scmp.eq.s32.totalorder %s17, 0
      %p121 = por %p119, %p120
      %p122 = scmp.ne.s32.totalorder %s114, %s116
      %p123 = scmp.eq.s32.totalorder %s22, 1
      %p124 = por %p122, %p123
      %p125 = scmp.ne.s32.totalorder %s116, %s117
      %p126 = scmp.eq.s32.totalorder %s22, 0
      %p127 = por %p125, %p126
      %p128 = scmp.ne.s32.totalorder %s116, %s117
      %p129 = scmp.eq.s32.totalorder %s23, 1
      %p130 = por %p128, %p129
      %p132 = scmp.ne.s32.totalorder %s117, %s131
      %p133 = scmp.eq.s32.totalorder %s23, 0
      %p134 = por %p132, %p133
      %s136 = sadd.s32 %s135, 1
      %p139 = scmp.eq.s32.totalorder %s17, 1
      %p140 = scmp.ne.s32.totalorder %s135, %s137
      %p141 = scmp.eq.s32.totalorder %s17, 0
      %p142 = por %p140, %p141
      %p143 = scmp.ne.s32.totalorder %s135, %s137
      %p144 = scmp.eq.s32.totalorder %s22, 1
      %p145 = por %p143, %p144
      %p146 = scmp.ne.s32.totalorder %s137, %s138
      %p147 = scmp.eq.s32.totalorder %s22, 0
      %p148 = por %p146, %p147
      %p149 = scmp.ne.s32.totalorder %s137, %s138
      %p150 = scmp.eq.s32.totalorder %s23, 1
      %p151 = por %p149, %p150
      %p153 = scmp.ne.s32.totalorder %s138, %s152
      %p154 = scmp.eq.s32.totalorder %s23, 0
      %p155 = por %p153, %p154
      %s157 = sadd.s32 %s156, 1
      %p160 = scmp.eq.s32.totalorder %s17, 1
      %p161 = scmp.ne.s32.totalorder %s156, %s158
      %p162 = scmp.eq.s32.totalorder %s17, 0
      %p163 = por %p161, %p162
      %p164 = scmp.ne.s32.totalorder %s156, %s158
      %p165 = scmp.eq.s32.totalorder %s22, 1
      %p166 = por %p164, %p165
      %p167 = scmp.ne.s32.totalorder %s158, %s159
      %p168 = scmp.eq.s32.totalorder %s22, 0
      %p169 = por %p167, %p168
      %p170 = scmp.ne.s32.totalorder %s158, %s159
      %p171 = scmp.eq.s32.totalorder %s23, 1
      %p172 = por %p170, %p171
      %p174 = scmp.ne.s32.totalorder %s159, %s173
      %p175 = scmp.eq.s32.totalorder %s23, 0
      %p176 = por %p174, %p175
      %s178 = sadd.s32 %s177, 1
      %p181 = scmp.eq.s32.totalorder %s17, 1
      %p182 = scmp.ne.s32.totalorder %s177, %s179
      %p183 = scmp.eq.s32.totalorder %s17, 0
      %p184 = por %p182, %p183
      %p185 = scmp.ne.s32.totalorder %s177, %s179
      %p186 = scmp.eq.s32.totalorder %s22, 1
      %p187 = por %p185, %p186
      %p188 = scmp.ne.s32.totalorder %s179, %s180
      %p189 = scmp.eq.s32.totalorder %s22, 0
      %p190 = por %p188, %p189
      %p191 = scmp.ne.s32.totalorder %s179, %s180
      %p192 = scmp.eq.s32.totalorder %s23, 1
      %p193 = por %p191, %p192
      %p195 = scmp.ne.s32.totalorder %s180, %s194
      %p196 = scmp.eq.s32.totalorder %s23, 0
      %p197 = por %p195, %p196
      %s198 = ssub.s32 %s17, %s24
      %p199 = scmp.eq.s32.totalorder %s198, 0
      %s201 = sadd.s32 %s200, 1
      %s202 = scalar_select %p199, %s200, %s201
      %p205 = pneg %p199
      %p206 = scmp.eq.s32.totalorder %s17, 1
      %p207 = por %p205, %p206
      %p208 = scmp.ne.s32.totalorder %s200, %s203
      %p209 = scmp.eq.s32.totalorder %s17, 0
      %p210 = por %p208, %p209
      %p211 = scmp.ne.s32.totalorder %s200, %s203
      %p212 = scmp.eq.s32.totalorder %s22, 1
      %p213 = por %p211, %p212
      %p214 = scmp.ne.s32.totalorder %s203, %s204
      %p215 = scmp.eq.s32.totalorder %s22, 0
      %p216 = por %p214, %p215
      %p217 = scmp.ne.s32.totalorder %s203, %s204
      %p218 = scmp.eq.s32.totalorder %s23, 1
      %p219 = por %p217, %p218
      %p221 = scmp.ne.s32.totalorder %s204, %s220
      %p222 = scmp.eq.s32.totalorder %s23, 0
      %p223 = por %p221, %p222
      %p224 = scmp.le.s32.totalorder 1, %s17
      %p225 = scmp.lt.s32.totalorder %s17, 3
      %p226 = pnand %p224, %p225
      %p227 = pneg %p226
      // Predicated region
      $region9: #{tpu_custom_call.1} parent=5 // pred_check
        _
      $region10: #{tpu_custom_call.1} parent=5 // pred_check_branch
        %229 = sbr.rel (%p226) target = $region12
      $region11: #{tpu_custom_call.1} parent=5 // pred_region
        %s230 = ssub.s32 %s17, 1
        // Predicated region
        $region13: #{tpu_custom_call.1} parent=11 // pred_check
          %p231 = pneg %p64
        $region14: #{tpu_custom_call.1} parent=11 // pred_check_branch
          %233 = sbr.rel (%p231) target = $region16
        $region15: #{tpu_custom_call.1} parent=11 // pred_region
          _
        $region16: #{tpu_custom_call.1} parent=11 // pred_fallthru
          _
        // Predicated region
        $region17: #{tpu_custom_call.1} parent=11 // pred_check
          %p234 = pneg %p85
        $region18: #{tpu_custom_call.1} parent=11 // pred_check_branch
          %236 = sbr.rel (%p234) target = $region20
        $region19: #{tpu_custom_call.1} parent=11 // pred_region
          _
        $region20: #{tpu_custom_call.1} parent=11 // pred_fallthru
          _
        // Predicated region
        $region21: #{tpu_custom_call.1} parent=11 // pred_check
          %p237 = pneg %p106
        $region22: #{tpu_custom_call.1} parent=11 // pred_check_branch
          %239 = sbr.rel (%p237) target = $region24
        $region23: #{tpu_custom_call.1} parent=11 // pred_region
          _
        $region24: #{tpu_custom_call.1} parent=11 // pred_fallthru
          _
        // Predicated region
        $region25: #{tpu_custom_call.1} parent=11 // pred_check
          %p240 = pneg %p127
        $region26: #{tpu_custom_call.1} parent=11 // pred_check_branch
          %242 = sbr.rel (%p240) target = $region28
        $region27: #{tpu_custom_call.1} parent=11 // pred_region
          _
        $region28: #{tpu_custom_call.1} parent=11 // pred_fallthru
          _
        // Predicated region
        $region29: #{tpu_custom_call.1} parent=11 // pred_check
          %p243 = pneg %p148
        $region30: #{tpu_custom_call.1} parent=11 // pred_check_branch
          %245 = sbr.rel (%p243) target = $region32
        $region31: #{tpu_custom_call.1} parent=11 // pred_region
          _
        $region32: #{tpu_custom_call.1} parent=11 // pred_fallthru
          _
        // Predicated region
        $region33: #{tpu_custom_call.1} parent=11 // pred_check
          %p246 = pneg %p169
        $region34: #{tpu_custom_call.1} parent=11 // pred_check_branch
          %248 = sbr.rel (%p246) target = $region36
        $region35: #{tpu_custom_call.1} parent=11 // pred_region
          _
        $region36: #{tpu_custom_call.1} parent=11 // pred_fallthru
          _
        // Predicated region
        $region37: #{tpu_custom_call.1} parent=11 // pred_check
          %p249 = pneg %p190
        $region38: #{tpu_custom_call.1} parent=11 // pred_check_branch
          %251 = sbr.rel (%p249) target = $region40
        $region39: #{tpu_custom_call.1} parent=11 // pred_region
          _
        $region40: #{tpu_custom_call.1} parent=11 // pred_fallthru
          _
      $region12: #{tpu_custom_call.1} parent=5 // pred_fallthru
        _
      %p252 = scmp.lt.s32.totalorder %s17, 2
      // Predicated region
      $region41: #{tpu_custom_call.1} parent=5 // pred_check
        %p253 = pneg %p252
      $region42: #{tpu_custom_call.1} parent=5 // pred_check_branch
        %255 = sbr.rel (%p253) target = $region44
      $region43: #{tpu_custom_call.1} parent=5 // pred_region
        // Predicated region
        $region45: #{tpu_custom_call.1} parent=43 // pred_check
          %p256 = pneg %p37
        $region46: #{tpu_custom_call.1} parent=43 // pred_check_branch
          %258 = sbr.rel (%p256) target = $region48
        $region47: #{tpu_custom_call.1} parent=43 // pred_region
          %p259 = scmp.lt.s32.totalorder %s17, 1
          %s260 = scalar_select %p259, %s17, 1
          %s261 = smul.addr %s260, 8
          %s262 = scalar_lea.vmem %s0, %s261
        $region48: #{tpu_custom_call.1} parent=43 // pred_fallthru
          _
      $region44: #{tpu_custom_call.1} parent=5 // pred_fallthru
        _
      %p263 = scmp.le.s32.totalorder 1, %s17
      %p264 = scmp.lt.s32.totalorder %s17, 3
      %p265 = pnand %p263, %p264
      %p266 = pneg %p265
      // Predicated region
      $region49: #{tpu_custom_call.1} parent=5 // pred_check
        _
      $region50: #{tpu_custom_call.1} parent=5 // pred_check_branch
        %268 = sbr.rel (%p265) target = $region52
      $region51: #{tpu_custom_call.1} parent=5 // pred_region
        %s269 = ssub.s32 %s17, 1
        %p270 = scmp.lt.s32.totalorder %s22, 1
        %s271 = scalar_select %p270, %s22, 1
        %s272 = smul.addr %s271, 8
        %s273 = scalar_lea.vmem %s0, %s272
        %p274 = pneg %p43
        %p275 = pneg %p40
        %p276 = pneg %p64
        %p277 = pneg %p61
        %p278 = pneg %p85
        %p279 = pneg %p82
        %p280 = pneg %p106
        %p281 = pneg %p103
        %p282 = pneg %p127
        %p283 = pneg %p124
        %p284 = pneg %p148
        %p285 = pneg %p145
        %p286 = pneg %p169
        %p287 = pneg %p166
        %p288 = pneg %p190
        %p289 = pneg %p187
        %p290 = pneg %p216
        %p291 = pneg %p213
        %s292 = sand.u32 %s203, 1
        %s293 = scalar_lea.sflag [#allocation3], %s292
        %s294 = sand.u32 %s203, 1
        %s295 = scalar_lea.vmem [#allocation2], %s294
        %p296 = scmp.lt.s32.totalorder %s22, 1
        %s297 = scalar_select %p296, %s22, 1
        %s298 = smul.addr %s297, 8
        %s299 = scalar_lea.vmem %s0, %s298
        %v300 = vld [vmem:[%s299] sm:$0xff]
        %v301 = vld [vmem:[%s1] sm:$0xff]
        %v302 = vld [vmem:[%s1 + $0x8] sm:$0xff]
        %v303 = vld [vmem:[%s1 + $0x10] sm:$0xff]
        %v304 = vld [vmem:[%s1 + $0x18] sm:$0xff]
        %vm305 = vcmask 261120
        %v307 = vsel %vm305, %v300, 0
        %309 = vmatprep.subr.mxu0 0.0
        %310 = vmatpush1.msra.mxu0 %v301
        %311 = vmatprep.subr.mxu0 0.0
        %312 = vmatpush1.msra.mxu0 %v302
        %313 = vmatprep.subr.mxu0 0.0
        %314 = vmatpush1.msra.mxu0 %v303
        %315 = vmatprep.subr.mxu0 0.0
        %316 = vmatpush1.msra.mxu0 %v304
        %317 = vmatprep.subr.mxu0 0.0
        %318 = vmatpush1.msra.mxu0 0.0
        %319 = vmatprep.subr.mxu0 0.0
        %320 = vmatpush1.msra.mxu0 0.0
        %321 = vmatprep.subr.mxu0 0.0
        %322 = vmatpush1.msra.mxu0 0.0
        %323 = vmatprep.subr.mxu0 0.0
        %324 = vmatpush1.msra.mxu0 0.0
        %325 = vmatprep.subr.mxu0 0.0
        %326 = vmatpush1.msra.mxu0 0.0
        %327 = vmatprep.subr.mxu0 0.0
        %328 = vmatpush1.msra.mxu0 0.0
        %329 = vmatprep.subr.mxu0 0.0
        %330 = vmatpush1.msra.mxu0 0.0
        %331 = vmatprep.subr.mxu0 0.0
        %332 = vmatpush1.msra.mxu0 0.0
        %333 = vmatprep.subr.mxu0 0.0
        %334 = vmatpush1.msra.mxu0 0.0
        %335 = vmatprep.subr.mxu0 0.0
        %336 = vmatpush1.msra.mxu0 0.0
        %337 = vmatprep.subr.mxu0 0.0
        %338 = vmatpush1.msra.mxu0 0.0
        %339 = vmatprep.subr.mxu0 0.0
        %340 = vmatpush1.msra.mxu0 0.0
        %341 = vmatprep.subr.mxu0 0.0
        %342 = vmatpush1.msra.mxu0 0.0
        %343 = vmatprep.subr.mxu0 0.0
        %344 = vmatpush1.msra.mxu0 0.0
        %345 = vmatprep.subr.mxu0 0.0
        %346 = vmatpush1.msra.mxu0 0.0
        %347 = vmatprep.subr.mxu0 0.0
        %348 = vmatpush1.msra.mxu0 0.0
        %349 = vmatprep.subr.mxu0 0.0
        %350 = vmatpush1.msra.mxu0 0.0
        %351 = vmatprep.subr.mxu0 0.0
        %352 = vmatpush1.msra.mxu0 0.0
        %353 = vmatprep.subr.mxu0 0.0
        %354 = vmatpush1.msra.mxu0 0.0
        %355 = vmatprep.subr.mxu0 0.0
        %356 = vmatpush1.msra.mxu0 0.0
        %357 = vmatprep.subr.mxu0 0.0
        %358 = vmatpush1.msra.mxu0 0.0
        %359 = vmatprep.subr.mxu0 0.0
        %360 = vmatpush1.msra.mxu0 0.0
        %361 = vmatprep.subr.mxu0 0.0
        %362 = vmatpush1.msra.mxu0 0.0
        %363 = vmatprep.subr.mxu0 0.0
        %364 = vmatpush1.msra.mxu0 0.0
        %365 = vmatprep.subr.mxu0 0.0
        %366 = vmatpush1.msra.mxu0 0.0
        %367 = vmatprep.subr.mxu0 0.0
        %368 = vmatpush1.msra.mxu0 0.0
        %369 = vmatprep.subr.mxu0 0.0
        %370 = vmatpush1.msra.mxu0 0.0
        %371 = vmatprep.subr.mxu0 0.0
        %372 = vmatpush1.msra.mxu0 0.0
        %373 = vmatprep.mubr.f32.mxu0 0.0
        %374 = vmatmul.mubr.f32.gmra.mrb[0].mxu0 %v307
        %v375 = vpop.f32.mrb[0].mxu0
        %v376 = vadd.f32 0.0, %v375
        %v377 = vpop.f32.mrb[0].mxu0
        %378 = vdwg.mxu0
        %v379 = vld [vmem:[%s2] sm:$0xff]
        %v380 = vld [vmem:[%s2 + $0x8] sm:$0xff]
        %v381 = vld [vmem:[%s2 + $0x10] sm:$0xff]
        %v382 = vld [vmem:[%s2 + $0x18] sm:$0xff]
        %v383 = vld [vmem:[%s2 + $0x20] sm:$0xff]
        %v384 = vld [vmem:[%s2 + $0x28] sm:$0xff]
        %v385 = vld [vmem:[%s2 + $0x30] sm:$0xff]
        %v386 = vld [vmem:[%s2 + $0x38] sm:$0xff]
        %vm387 = vcmask 523264
        %v389 = vsel %vm387, %v376, 0
        %391 = vmatprep.subr.mxu0 0.0
        %392 = vmatpush1.msra.mxu0 %v379
        %393 = vmatprep.subr.mxu0 0.0
        %394 = vmatpush1.msra.mxu0 %v380
        %395 = vmatprep.subr.mxu0 0.0
        %396 = vmatpush1.msra.mxu0 %v381
        %397 = vmatprep.subr.mxu0 0.0
        %398 = vmatpush1.msra.mxu0 %v382
        %399 = vmatprep.subr.mxu0 0.0
        %400 = vmatpush1.msra.mxu0 %v383
        %401 = vmatprep.subr.mxu0 0.0
        %402 = vmatpush1.msra.mxu0 %v384
        %403 = vmatprep.subr.mxu0 0.0
        %404 = vmatpush1.msra.mxu0 %v385
        %405 = vmatprep.subr.mxu0 0.0
        %406 = vmatpush1.msra.mxu0 %v386
        %407 = vmatprep.subr.mxu0 0.0
        %408 = vmatpush1.msra.mxu0 0.0
        %409 = vmatprep.subr.mxu0 0.0
        %410 = vmatpush1.msra.mxu0 0.0
        %411 = vmatprep.subr.mxu0 0.0
        %412 = vmatpush1.msra.mxu0 0.0
        %413 = vmatprep.subr.mxu0 0.0
        %414 = vmatpush1.msra.mxu0 0.0
        %415 = vmatprep.subr.mxu0 0.0
        %416 = vmatpush1.msra.mxu0 0.0
        %417 = vmatprep.subr.mxu0 0.0
        %418 = vmatpush1.msra.mxu0 0.0
        %419 = vmatprep.subr.mxu0 0.0
        %420 = vmatpush1.msra.mxu0 0.0
        %421 = vmatprep.subr.mxu0 0.0
        %422 = vmatpush1.msra.mxu0 0.0
        %423 = vmatprep.subr.mxu0 0.0
        %424 = vmatpush1.msra.mxu0 0.0
        %425 = vmatprep.subr.mxu0 0.0
        %426 = vmatpush1.msra.mxu0 0.0
        %427 = vmatprep.subr.mxu0 0.0
        %428 = vmatpush1.msra.mxu0 0.0
        %429 = vmatprep.subr.mxu0 0.0
        %430 = vmatpush1.msra.mxu0 0.0
        %431 = vmatprep.subr.mxu0 0.0
        %432 = vmatpush1.msra.mxu0 0.0
        %433 = vmatprep.subr.mxu0 0.0
        %434 = vmatpush1.msra.mxu0 0.0
        %435 = vmatprep.subr.mxu0 0.0
        %436 = vmatpush1.msra.mxu0 0.0
        %437 = vmatprep.subr.mxu0 0.0
        %438 = vmatpush1.msra.mxu0 0.0
        %439 = vmatprep.subr.mxu0 0.0
        %440 = vmatpush1.msra.mxu0 0.0
        %441 = vmatprep.subr.mxu0 0.0
        %442 = vmatpush1.msra.mxu0 0.0
        %443 = vmatprep.subr.mxu0 0.0
        %444 = vmatpush1.msra.mxu0 0.0
        %445 = vmatprep.subr.mxu0 0.0
        %446 = vmatpush1.msra.mxu0 0.0
        %447 = vmatprep.subr.mxu0 0.0
        %448 = vmatpush1.msra.mxu0 0.0
        %449 = vmatprep.subr.mxu0 0.0
        %450 = vmatpush1.msra.mxu0 0.0
        %451 = vmatprep.subr.mxu0 0.0
        %452 = vmatpush1.msra.mxu0 0.0
        %453 = vmatprep.subr.mxu0 0.0
        %454 = vmatpush1.msra.mxu0 0.0
        %455 = vmatprep.mubr.f32.mxu0 0.0
        %456 = vmatmul.mubr.f32.gmra.mrb[0].mxu0 %v389
        %v457 = vpop.f32.mrb[0].mxu0
        %v458 = vadd.f32 0.0, %v457
        %v459 = vpop.f32.mrb[0].mxu0
        %460 = vdwg.mxu0
        %v461 = vxor.u32 %v458, 2147483648
        %v462 = vmul.f32 %v461, 1.442695
        %v463 = vpow.pop %v462
        %v464 = vadd.f32 %v463, 1.0
        %v465 = vrcp.pop %v464
        %v466 = vmul.f32 1.0, %v465
        %v467 = vld [vmem:[%s3] sm:$0xff]
        %v468 = vld [vmem:[%s3 + $0x8] sm:$0xff]
        %v469 = vld [vmem:[%s3 + $0x10] sm:$0xff]
        %v470 = vld [vmem:[%s3 + $0x18] sm:$0xff]
        %v471 = vld [vmem:[%s3 + $0x20] sm:$0xff]
        %v472 = vld [vmem:[%s3 + $0x28] sm:$0xff]
        %v473 = vld [vmem:[%s3 + $0x30] sm:$0xff]
        %v474 = vld [vmem:[%s3 + $0x38] sm:$0xff]
        %v475 = vld [vmem:[%s4] sm:$0x1]
        %v477 = vlaneseq
        %v478 = vshrl.u32 %v477, 7
        %v479 = vsub.s32 0, %v478
        %v480 = vrot.slane %v475, %v479
        %482 = vmatprep.subr.mxu0 0.0
        %483 = vmatpush1.msra.mxu0 %v467
        %484 = vmatprep.subr.mxu0 0.0
        %485 = vmatpush1.msra.mxu0 %v468
        %486 = vmatprep.subr.mxu0 0.0
        %487 = vmatpush1.msra.mxu0 %v469
        %488 = vmatprep.subr.mxu0 0.0
        %489 = vmatpush1.msra.mxu0 %v470
        %490 = vmatprep.subr.mxu0 0.0
        %491 = vmatpush1.msra.mxu0 %v471
        %492 = vmatprep.subr.mxu0 0.0
        %493 = vmatpush1.msra.mxu0 %v472
        %494 = vmatprep.subr.mxu0 0.0
        %495 = vmatpush1.msra.mxu0 %v473
        %496 = vmatprep.subr.mxu0 0.0
        %497 = vmatpush1.msra.mxu0 %v474
        %498 = vmatprep.subr.mxu0 0.0
        %499 = vmatpush1.msra.mxu0 0.0
        %500 = vmatprep.subr.mxu0 0.0
        %501 = vmatpush1.msra.mxu0 0.0
        %502 = vmatprep.subr.mxu0 0.0
        %503 = vmatpush1.msra.mxu0 0.0
        %504 = vmatprep.subr.mxu0 0.0
        %505 = vmatpush1.msra.mxu0 0.0
        %506 = vmatprep.subr.mxu0 0.0
        %507 = vmatpush1.msra.mxu0 0.0
        %508 = vmatprep.subr.mxu0 0.0
        %509 = vmatpush1.msra.mxu0 0.0
        %510 = vmatprep.subr.mxu0 0.0
        %511 = vmatpush1.msra.mxu0 0.0
        %512 = vmatprep.subr.mxu0 0.0
        %513 = vmatpush1.msra.mxu0 0.0
        %514 = vmatprep.subr.mxu0 0.0
        %515 = vmatpush1.msra.mxu0 0.0
        %516 = vmatprep.subr.mxu0 0.0
        %517 = vmatpush1.msra.mxu0 0.0
        %518 = vmatprep.subr.mxu0 0.0
        %519 = vmatpush1.msra.mxu0 0.0
        %520 = vmatprep.subr.mxu0 0.0
        %521 = vmatpush1.msra.mxu0 0.0
        %522 = vmatprep.subr.mxu0 0.0
        %523 = vmatpush1.msra.mxu0 0.0
        %524 = vmatprep.subr.mxu0 0.0
        %525 = vmatpush1.msra.mxu0 0.0
        %526 = vmatprep.subr.mxu0 0.0
        %527 = vmatpush1.msra.mxu0 0.0
        %528 = vmatprep.subr.mxu0 0.0
        %529 = vmatpush1.msra.mxu0 0.0
        %530 = vmatprep.subr.mxu0 0.0
        %531 = vmatpush1.msra.mxu0 0.0
        %532 = vmatprep.subr.mxu0 0.0
        %533 = vmatpush1.msra.mxu0 0.0
        %534 = vmatprep.subr.mxu0 0.0
        %535 = vmatpush1.msra.mxu0 0.0
        %536 = vmatprep.subr.mxu0 0.0
        %537 = vmatpush1.msra.mxu0 0.0
        %538 = vmatprep.subr.mxu0 0.0
        %539 = vmatpush1.msra.mxu0 0.0
        %540 = vmatprep.subr.mxu0 0.0
        %541 = vmatpush1.msra.mxu0 0.0
        %542 = vmatprep.subr.mxu0 0.0
        %543 = vmatpush1.msra.mxu0 0.0
        %544 = vmatprep.subr.mxu0 0.0
        %545 = vmatpush1.msra.mxu0 0.0
        %546 = vmatprep.mubr.f32.mxu0 0.0
        %547 = vmatmul.mubr.f32.gmra.mrb[0].mxu0 %v389
        %v548 = vpop.f32.mrb[0].mxu0
        %v549 = vadd.f32 %v480, %v548
        %v550 = vpop.f32.mrb[0].mxu0
        %551 = vdwg.mxu0
        %vm552 = vcmask 64512
        %v553 = vsel %vm552, %v549, -inf
        %554 = vmax.xlane.f32.xlu0 %v553
        %v555 = vpop.xlane.xlu0 %554
        %v556 = vsub.f32 %v549, %v555
        %v557 = vmul.f32 %v556, 1.442695
        %v558 = vpow.pop %v557
        %v559 = vsel %vm552, %v558, 0.0
        %560 = vadd.xlane.f32.xlu0 %v559
        %v561 = vpop.xlane.xlu0 %560
        %v562 = vrcp.pop %v561
        %v563 = vmul.f32 %v558, %v562
        %565 = vset.pattern.permute.xlu0 0
        %566 = vperm.xlu0 %565, %v466
        %v567 = vpop.permute.xlu0 %566
        %v569 = vmul.f32 %v563, %v567
        %vm570 = vcmask 130112
        %v571 = vsel %vm570, %v549, -inf
        %572 = vmax.xlane.f32.xlu0 %v571
        %v573 = vpop.xlane.xlu0 %572
        %v574 = vsub.f32 %v549, %v573
        %v575 = vmul.f32 %v574, 1.442695
        %v576 = vpow.pop %v575
        %578 = vrot.lane.b32.xlu0 %v576, 120
        %v579 = vpop.permute.xlu0 %578
        %v581 = vsel %vm552, %v579, 0.0
        %582 = vadd.xlane.f32.xlu0 %v581
        %v583 = vpop.xlane.xlu0 %582
        %v584 = vrcp.pop %v583
        %v585 = vmul.f32 %v576, %v584
        %586 = vset.pattern.permute.xlu0 1
        %587 = vperm.xlu0 %586, %v466
        %v588 = vpop.permute.xlu0 %587
        %v590 = vmul.f32 %v585, %v588
        %vm591 = vcmask 195712
        %v592 = vsel %vm591, %v549, -inf
        %593 = vmax.xlane.f32.xlu0 %v592
        %v594 = vpop.xlane.xlu0 %593
        %v595 = vsub.f32 %v549, %v594
        %v596 = vmul.f32 %v595, 1.442695
        %v597 = vpow.pop %v596
        %599 = vrot.lane.b32.xlu0 %v597, 112
        %v600 = vpop.permute.xlu0 %599
        %v602 = vsel %vm552, %v600, 0.0
        %603 = vadd.xlane.f32.xlu0 %v602
        %v604 = vpop.xlane.xlu0 %603
        %v605 = vrcp.pop %v604
        %v606 = vmul.f32 %v597, %v605
        %607 = vset.pattern.permute.xlu0 2
        %608 = vperm.xlu0 %607, %v466
        %v609 = vpop.permute.xlu0 %608
        %v611 = vmul.f32 %v606, %v609
        %vm612 = vcmask 261312
        %v613 = vsel %vm612, %v549, -inf
        %614 = vmax.xlane.f32.xlu0 %v613
        %v615 = vpop.xlane.xlu0 %614
        %v616 = vsub.f32 %v549, %v615
        %v617 = vmul.f32 %v616, 1.442695
        %v618 = vpow.pop %v617
        %620 = vrot.lane.b32.xlu0 %v618, 104
        %v621 = vpop.permute.xlu0 %620
        %v623 = vsel %vm552, %v621, 0.0
        %624 = vadd.xlane.f32.xlu0 %v623
        %v625 = vpop.xlane.xlu0 %624
        %v626 = vrcp.pop %v625
        %v627 = vmul.f32 %v618, %v626
        %628 = vset.pattern.permute.xlu0 3
        %629 = vperm.xlu0 %628, %v466
        %v630 = vpop.permute.xlu0 %629
        %v632 = vmul.f32 %v627, %v630
        %v633 = vsel %vm552, %v569, %v590
        %vm634 = vcmask 130048
        %v635 = vsel %vm634, %v633, %v611
        %vm636 = vcmask 195584
        %v637 = vsel %vm636, %v635, %v632
        %v638 = vld [vmem:[%s5] sm:$0xff]
        %v639 = vld [vmem:[%s5 + $0x8] sm:$0xff]
        %v640 = vld [vmem:[%s6] sm:$0xff]
        %v641 = vld [vmem:[%s6 + $0x8] sm:$0xff]
        %v642 = vld [vmem:[%s7] sm:$0xff]
        %v643 = vld [vmem:[%s7 + $0x8] sm:$0xff]
        %644 = vxpose.xlu0.b32.start [1/16] %v376, 128
        %645 = vxpose.xlu0.b32.cont [2/16] 0.0, 128
        %646 = vxpose.xlu0.b32.cont [3/16] 0.0, 128
        %647 = vxpose.xlu0.b32.cont [4/16] 0.0, 128
        %648 = vxpose.xlu0.b32.cont [5/16] 0.0, 128
        %649 = vxpose.xlu0.b32.cont [6/16] 0.0, 128
        %650 = vxpose.xlu0.b32.cont [7/16] 0.0, 128
        %651 = vxpose.xlu0.b32.cont [8/16] 0.0, 128
        %652 = vxpose.xlu0.b32.cont [9/16] 0.0, 128
        %653 = vxpose.xlu0.b32.cont [10/16] 0.0, 128
        %654 = vxpose.xlu0.b32.cont [11/16] 0.0, 128
        %655 = vxpose.xlu0.b32.cont [12/16] 0.0, 128
        %656 = vxpose.xlu0.b32.cont [13/16] 0.0, 128
        %657 = vxpose.xlu0.b32.cont [14/16] 0.0, 128
        %658 = vxpose.xlu0.b32.cont [15/16] 0.0, 128
        %659 = vxpose.xlu0.b32.end [16/16] 0.0, 128
        %v660 = vpop.trf.xlu0
        %v661 = vpop.trf.xlu0
        %v662 = vpop.trf.xlu0
        %v663 = vpop.trf.xlu0
        %v664 = vpop.trf.xlu0
        %v665 = vpop.trf.xlu0
        %v666 = vpop.trf.xlu0
        %v667 = vpop.trf.xlu0
        %v668 = vpop.trf.xlu0
        %v669 = vpop.trf.xlu0
        %v670 = vpop.trf.xlu0
        %v671 = vpop.trf.xlu0
        %v672 = vpop.trf.xlu0
        %v673 = vpop.trf.xlu0
        %v674 = vpop.trf.xlu0
        %v675 = vpop.trf.xlu0
        %v677 = vsel %vm552, %v660, 0
        %v680 = vsel %vm552, %v661, 0
        %v683 = vsel %vm552, %v662, 0
        %v686 = vsel %vm552, %v663, 0
        %v689 = vsel %vm552, %v664, 0
        %v692 = vsel %vm552, %v665, 0
        %v695 = vsel %vm552, %v666, 0
        %v698 = vsel %vm552, %v667, 0
        %700 = vmatprep.subr.mxu0 0.0
        %701 = vmatpush1.msra.mxu0 %v637
        %702 = vmatprep.subr.mxu0 0.0
        %703 = vmatpush1.msra.mxu0 0.0
        %704 = vmatprep.subr.mxu0 0.0
        %705 = vmatpush1.msra.mxu0 0.0
        %706 = vmatprep.subr.mxu0 0.0
        %707 = vmatpush1.msra.mxu0 0.0
        %708 = vmatprep.subr.mxu0 0.0
        %709 = vmatpush1.msra.mxu0 0.0
        %710 = vmatprep.subr.mxu0 0.0
        %711 = vmatpush1.msra.mxu0 0.0
        %712 = vmatprep.subr.mxu0 0.0
        %713 = vmatpush1.msra.mxu0 0.0
        %714 = vmatprep.subr.mxu0 0.0
        %715 = vmatpush1.msra.mxu0 0.0
        %716 = vmatprep.subr.mxu0 0.0
        %717 = vmatpush1.msra.mxu0 0.0
        %718 = vmatprep.subr.mxu0 0.0
        %719 = vmatpush1.msra.mxu0 0.0
        %720 = vmatprep.subr.mxu0 0.0
        %721 = vmatpush1.msra.mxu0 0.0
        %722 = vmatprep.subr.mxu0 0.0
        %723 = vmatpush1.msra.mxu0 0.0
        %724 = vmatprep.subr.mxu0 0.0
        %725 = vmatpush1.msra.mxu0 0.0
        %726 = vmatprep.subr.mxu0 0.0
        %727 = vmatpush1.msra.mxu0 0.0
        %728 = vmatprep.subr.mxu0 0.0
        %729 = vmatpush1.msra.mxu0 0.0
        %730 = vmatprep.subr.mxu0 0.0
        %731 = vmatpush1.msra.mxu0 0.0
        %732 = vmatprep.subr.mxu0 0.0
        %733 = vmatpush1.msra.mxu0 0.0
        %734 = vmatprep.subr.mxu0 0.0
        %735 = vmatpush1.msra.mxu0 0.0
        %736 = vmatprep.subr.mxu0 0.0
        %737 = vmatpush1.msra.mxu0 0.0
        %738 = vmatprep.subr.mxu0 0.0
        %739 = vmatpush1.msra.mxu0 0.0
        %740 = vmatprep.subr.mxu0 0.0
        %741 = vmatpush1.msra.mxu0 0.0
        %742 = vmatprep.subr.mxu0 0.0
        %743 = vmatpush1.msra.mxu0 0.0
        %744 = vmatprep.subr.mxu0 0.0
        %745 = vmatpush1.msra.mxu0 0.0
        %746 = vmatprep.subr.mxu0 0.0
        %747 = vmatpush1.msra.mxu0 0.0
        %748 = vmatprep.subr.mxu0 0.0
        %749 = vmatpush1.msra.mxu0 0.0
        %750 = vmatprep.subr.mxu0 0.0
        %751 = vmatpush1.msra.mxu0 0.0
        %752 = vmatprep.subr.mxu0 0.0
        %753 = vmatpush1.msra.mxu0 0.0
        %754 = vmatprep.subr.mxu0 0.0
        %755 = vmatpush1.msra.mxu0 0.0
        %756 = vmatprep.subr.mxu0 0.0
        %757 = vmatpush1.msra.mxu0 0.0
        %758 = vmatprep.subr.mxu0 0.0
        %759 = vmatpush1.msra.mxu0 0.0
        %760 = vmatprep.subr.mxu0 0.0
        %761 = vmatpush1.msra.mxu0 0.0
        %762 = vmatprep.subr.mxu0 0.0
        %763 = vmatpush1.msra.mxu0 0.0
        %764 = vmatprep.mubr.f32.mxu0 0.0
        %765 = vmatmul.mubr.f32.gmra.mrb[0].mxu0 %v677
        %v766 = vpop.f32.mrb[0].mxu0
        %v767 = vadd.f32 0.0, %v766
        %v768 = vpop.f32.mrb[0].mxu0
        %769 = vmatprep.mubr.f32.mxu0 0.0
        %770 = vmatmul.mubr.f32.gmra.mrb[0].mxu0 %v680
        %v771 = vpop.f32.mrb[0].mxu0
        %v772 = vadd.f32 0.0, %v771
        %v773 = vpop.f32.mrb[0].mxu0
        %774 = vmatprep.mubr.f32.mxu0 0.0
        %775 = vmatmul.mubr.f32.gmra.mrb[0].mxu0 %v683
        %v776 = vpop.f32.mrb[0].mxu0
        %v777 = vadd.f32 0.0, %v776
        %v778 = vpop.f32.mrb[0].mxu0
        %779 = vmatprep.mubr.f32.mxu0 0.0
        %780 = vmatmul.mubr.f32.gmra.mrb[0].mxu0 %v686
        %v781 = vpop.f32.mrb[0].mxu0
        %v782 = vadd.f32 0.0, %v781
        %v783 = vpop.f32.mrb[0].mxu0
        %784 = vmatprep.mubr.f32.mxu0 0.0
        %785 = vmatmul.mubr.f32.gmra.mrb[0].mxu0 %v689
        %v786 = vpop.f32.mrb[0].mxu0
        %v787 = vadd.f32 0.0, %v786
        %v788 = vpop.f32.mrb[0].mxu0
        %789 = vmatprep.mubr.f32.mxu0 0.0
        %790 = vmatmul.mubr.f32.gmra.mrb[0].mxu0 %v692
        %v791 = vpop.f32.mrb[0].mxu0
        %v792 = vadd.f32 0.0, %v791
        %v793 = vpop.f32.mrb[0].mxu0
        %794 = vmatprep.mubr.f32.mxu0 0.0
        %795 = vmatmul.mubr.f32.gmra.mrb[0].mxu0 %v695
        %v796 = vpop.f32.mrb[0].mxu0
        %v797 = vadd.f32 0.0, %v796
        %v798 = vpop.f32.mrb[0].mxu0
        %799 = vmatprep.mubr.f32.mxu0 0.0
        %800 = vmatmul.mubr.f32.gmra.mrb[0].mxu0 %v698
        %v801 = vpop.f32.mrb[0].mxu0
        %v802 = vadd.f32 0.0, %v801
        %v803 = vpop.f32.mrb[0].mxu0
        %804 = vdwg.mxu0
        %807 = vrot.lane.b32.xlu0 %v777, 120
        %v808 = vpop.permute.xlu0 %807
        %809 = vrot.lane.b32.xlu0 %v782, 120
        %v810 = vpop.permute.xlu0 %809
        %v813 = vadd.f32 %v767, %v808
        %v814 = vadd.f32 %v772, %v810
        %817 = vrot.lane.b32.xlu0 %v787, 112
        %v818 = vpop.permute.xlu0 %817
        %819 = vrot.lane.b32.xlu0 %v792, 112
        %v820 = vpop.permute.xlu0 %819
        %v823 = vadd.f32 %v813, %v818
        %v824 = vadd.f32 %v814, %v820
        %827 = vrot.lane.b32.xlu0 %v797, 104
        %v828 = vpop.permute.xlu0 %827
        %829 = vrot.lane.b32.xlu0 %v802, 104
        %v830 = vpop.permute.xlu0 %829
        %v833 = vadd.f32 %v823, %v828
        %v834 = vadd.f32 %v824, %v830
        %v835 = vsel %vm305, %v637, 0.0
        %v836 = vrot.slane %v835, 4
        %v837 = vadd.f32 %v835, %v836
        %v838 = vrot.slane %v837, 2
        %v839 = vadd.f32 %v837, %v838
        %v840 = vrot.slane %v839, 1
        %v841 = vadd.f32 %v839, %v840
        %843 = vrot.lane.b32.xlu0 %v841, 120
        %v844 = vpop.permute.xlu0 %843
        %v846 = vadd.f32 %v841, %v844
        %847 = vrot.lane.b32.xlu0 %v841, 112
        %v848 = vpop.permute.xlu0 %847
        %v850 = vadd.f32 %v846, %v848
        %851 = vrot.lane.b32.xlu0 %v841, 104
        %v852 = vpop.permute.xlu0 %851
        %v854 = vadd.f32 %v850, %v852
        %v855 = vmul.f32 %v854, 0.03125
        %v856 = vlaneseq
        %v857 = vshrl.u32 %v856, 7
        %v858 = vsub.s32 0, %v857
        %v859 = vrot.slane %v855, %v858
        %v860 = vmul.f32 %v859, %v638
        %v861 = vmul.f32 %v859, %v639
        %v862 = vsub.f32 %v833, %v860
        %v863 = vsub.f32 %v834, %v861
        %v864 = vmul.f32 %v862, %v862
        %v865 = vmul.f32 %v863, %v863
        %v866 = vsel %vm552, %v864, 0.0
        %v867 = vsel %vm552, %v865, 0.0
        %v868 = vadd.f32 %v866, %v867
        %v869 = vrot.slane %v868, 4
        %v870 = vadd.f32 %v868, %v869
        %v871 = vrot.slane %v870, 2
        %v872 = vadd.f32 %v870, %v871
        %v873 = vrot.slane %v872, 1
        %v874 = vadd.f32 %v872, %v873
        %v875 = vrsqrt.pop %v874
        %v876 = vmul.f32 %v874, %v875
        %vm877 = vcmp.eq.f32.partialorder %v874, inf
        %v878 = vsel %vm877, %v874, %v876
        %vm879 = vcmp.eq.f32.partialorder %v874, 0.0
        %v880 = vand.u32 %v874, 2147483648
        %v881 = vsel %vm879, %v880, %v878
        %v882 = vmax.f32 %v881, 1e-12
        %v883 = vrcp.pop %v882
        %v884 = vmul.f32 %v862, %v883
        %v885 = vmul.f32 %v863, %v883
        %v886 = vmul.f32 %v884, %v640
        %v887 = vmul.f32 %v885, %v641
        %v888 = vadd.f32 %v886, %v642
        %v889 = vadd.f32 %v887, %v643
        %v891 = vrot.slane %v888, 1
        %892 = vrot.lane.b32.xlu0 %v891, 8
        %v893 = vpop.permute.xlu0 %892
        %v895 = vrot.slane %v888, 2
        %896 = vrot.lane.b32.xlu0 %v895, 16
        %v897 = vpop.permute.xlu0 %896
        %v899 = vrot.slane %v888, 3
        %900 = vrot.lane.b32.xlu0 %v899, 24
        %v901 = vpop.permute.xlu0 %900
        %v903 = vrot.slane %v888, 4
        %904 = vrot.lane.b32.xlu0 %v903, 32
        %v905 = vpop.permute.xlu0 %904
        %v907 = vrot.slane %v888, 5
        %908 = vrot.lane.b32.xlu0 %v907, 40
        %v909 = vpop.permute.xlu0 %908
        %v911 = vrot.slane %v888, 6
        %912 = vrot.lane.b32.xlu0 %v911, 48
        %v913 = vpop.permute.xlu0 %912
        %v915 = vrot.slane %v888, 7
        %916 = vrot.lane.b32.xlu0 %v915, 56
        %v917 = vpop.permute.xlu0 %916
        %920 = vrot.lane.b32.xlu0 %v889, 64
        %v921 = vpop.permute.xlu0 %920
        %v923 = vrot.slane %v889, 1
        %924 = vrot.lane.b32.xlu0 %v923, 72
        %v925 = vpop.permute.xlu0 %924
        %v927 = vrot.slane %v889, 2
        %928 = vrot.lane.b32.xlu0 %v927, 80
        %v929 = vpop.permute.xlu0 %928
        %v931 = vrot.slane %v889, 3
        %932 = vrot.lane.b32.xlu0 %v931, 88
        %v933 = vpop.permute.xlu0 %932
        %v935 = vrot.slane %v889, 4
        %936 = vrot.lane.b32.xlu0 %v935, 96
        %v937 = vpop.permute.xlu0 %936
        %v939 = vrot.slane %v889, 5
        %940 = vrot.lane.b32.xlu0 %v939, 104
        %v941 = vpop.permute.xlu0 %940
        %v943 = vrot.slane %v889, 6
        %944 = vrot.lane.b32.xlu0 %v943, 112
        %v945 = vpop.permute.xlu0 %944
        %v947 = vrot.slane %v889, 7
        %948 = vrot.lane.b32.xlu0 %v947, 120
        %v949 = vpop.permute.xlu0 %948
        %v951 = vsel %vm552, %v888, %v893
        %v952 = vsel %vm634, %v951, %v897
        %v953 = vsel %vm636, %v952, %v901
        %v954 = vsel %vm305, %v953, %v905
        %vm955 = vcmask 326656
        %v956 = vsel %vm955, %v954, %v909
        %vm957 = vcmask 392192
        %v958 = vsel %vm957, %v956, %v913
        %vm959 = vcmask 457728
        %v960 = vsel %vm959, %v958, %v917
        %v961 = vsel %vm387, %v960, %v921
        %vm962 = vcmask 588800
        %v963 = vsel %vm962, %v961, %v925
        %vm964 = vcmask 654336
        %v965 = vsel %vm964, %v963, %v929
        %vm966 = vcmask 719872
        %v967 = vsel %vm966, %v965, %v933
        %vm968 = vcmask 785408
        %v969 = vsel %vm968, %v967, %v937
        %vm970 = vcmask 850944
        %v971 = vsel %vm970, %v969, %v941
        %vm972 = vcmask 916480
        %v973 = vsel %vm972, %v971, %v945
        %vm974 = vcmask 982016
        %v975 = vsel %vm974, %v973, %v949
        %976 = vst [vmem:[%s295] sm:$0x1] %v975
        %s977 = sand.u32 %s203, 1
        %s978 = scalar_lea.sflag [#allocation3], %s977
        %s979 = sand.u32 %s203, 1
        %s980 = scalar_lea.vmem [#allocation2], %s979
        // Predicated region
        $region53: #{tpu_custom_call.1} parent=51 // pred_check
          %p981 = pneg %p213
        $region54: #{tpu_custom_call.1} parent=51 // pred_check_branch
          %983 = sbr.rel (%p981) target = $region56
        $region55: #{tpu_custom_call.1} parent=51 // pred_region
          %s985 = ssub.s32 16, 16
          %986 = vsyncadd %s978, %s985
          %s987 = smul.addr %s22, 16
          %s988 = scalar_lea.hbm %s8, %s987
          %s990 = sshll.u32 %s980, 4
          %s991 = int_to_ptr.vmem [resolvable:$true] %s990
          %993 = dma.vmem_to_hbm [thread:$0]  %s991, 16, %s988, %s978
        $region56: #{tpu_custom_call.1} parent=51 // pred_fallthru
          _
      $region52: #{tpu_custom_call.1} parent=5 // pred_fallthru
        _
      %p994 = scmp.le.s32.totalorder 2, %s17
      // Predicated region
      $region57: #{tpu_custom_call.1} parent=5 // pred_check
        %p995 = pneg %p994
      $region58: #{tpu_custom_call.1} parent=5 // pred_check_branch
        %997 = sbr.rel (%p995) target = $region60
      $region59: #{tpu_custom_call.1} parent=5 // pred_region
        %s998 = ssub.s32 %s17, 2
        // Predicated region
        $region61: #{tpu_custom_call.1} parent=59 // pred_check
          %p999 = pneg %p219
        $region62: #{tpu_custom_call.1} parent=59 // pred_check_branch
          %1001 = sbr.rel (%p999) target = $region64
        $region63: #{tpu_custom_call.1} parent=59 // pred_region
          %s1002 = sand.u32 %s204, 1
          %s1003 = scalar_lea.sflag [#allocation3], %s1002
          %s1004 = sand.u32 %s204, 1
          %s1005 = scalar_lea.vmem [#allocation2], %s1004
          %1006 = dma.done %s1003, 16
        $region64: #{tpu_custom_call.1} parent=59 // pred_fallthru
          _
      $region60: #{tpu_custom_call.1} parent=5 // pred_fallthru
        _
    $region6: #{tpu_custom_call.1} parent=1 // loop_footer
      %s21 = sadd.s32 1, %s17
    $region7: #{tpu_custom_call.1} parent=1 // loop_footer_branch
      %16 = sbr.rel target = $region3
    $region8: #{tpu_custom_call.1} parent=1 // loop_exit
      _
    %1007 = vsyncpa [#allocation3], 1
    %s1008 = scalar_lea.sflag [#allocation3], 1
    %1009 = vsyncpa %s1008, 1

</llo_original>
